<compile_context>
chip_gen: v7x
topology: tpu7x:2x2x1
jax: 0.10.0
libtpu: 0.0.40
codegen_flags: <defaults>
</compile_context>

<pallas_src>
import functools
import math

import jax
import jax.numpy as jnp
from jax import lax
from jax.experimental import pallas as pl
from jax.experimental.pallas import tpu as pltpu

_LANE = 128


def _detect_vmem_budget():
    """~75% of physical per-core VMEM; conservative 48 MiB (v7x) if undetectable."""
    phys = 0
    try:
        get_info = getattr(pltpu, "get_tpu_info", None)
        if get_info is not None:
            info = get_info()
            for name in ("vmem_capacity_bytes", "vmem_size_bytes", "vmem_bytes"):
                val = getattr(info, name, None)
                if val:
                    phys = int(val)
                    break
    except Exception:
        phys = 0
    if phys <= 0:
        phys = 64 << 20  # smallest per-core VMEM across v5e/v6e/v7x
    return (phys * 3) // 4


def _masked_sum_f32(x, start, hw):
    """Sum x (..., L) over its last axis in f32; lanes whose global spatial position
    (start + lane) >= hw are zeroed first.  Robust to uninitialized physical padding
    lanes (L not a multiple of 128) and to out-of-bounds tails of partial blocks."""
    length = x.shape[-1]
    if isinstance(start, int) and start == 0 and length == hw and hw % _LANE == 0:
        return jnp.sum(x, axis=-1, dtype=jnp.float32)  # fully aligned: no mask needed
    pos = start + lax.broadcasted_iota(jnp.int32, (1, 1, length), 2)
    x = jnp.where(pos < hw, x, jnp.zeros((), x.dtype))
    return jnp.sum(x, axis=-1, dtype=jnp.float32)


def _excite(y, w1t_ref, w2t_ref):
    """sigmoid(gelu_exact(y @ W1^T) @ W2^T); y: (Bt, C) f32 -> (Bt, C) f32."""
    wdt = w1t_ref.dtype
    h = jnp.dot(y.astype(wdt), w1t_ref[...], preferred_element_type=jnp.float32)
    h = 0.5 * h * (1.0 + lax.erf(h * jnp.float32(1.0 / math.sqrt(2.0))))  # exact GELU
    s = jnp.dot(h.astype(wdt), w2t_ref[...], preferred_element_type=jnp.float32)
    return jax.nn.sigmoid(s)


def _se_resident_kernel(x_ref, w1t_ref, w2t_ref, o_ref, *, hw):
    # x_ref / o_ref: (Bt, C, HW) activation dtype.  The slab stays resident in VMEM so
    # the pool and the channel-wise rescale share a single HBM read (2x total traffic).
    y = _masked_sum_f32(x_ref[...], 0, hw) * jnp.float32(1.0 / hw)  # (Bt, C) f32
    s = _excite(y, w1t_ref, w2t_ref)                                # (Bt, C) f32
    o_ref[...] = x_ref[...] * s.astype(o_ref.dtype)[:, :, None]


def _se_gate_kernel(x_ref, w1t_ref, w2t_ref, g_ref, acc_ref, *, hw, chunk):
    # Chunked pool: grid = (B, K) over HW chunks; partial sums accumulate in an f32
    # scratch across the "arbitrary" K axis; the FC + sigmoid run on the last chunk.
    k = pl.program_id(1)

    @pl.when(k == 0)
    def _init():
        acc_ref[...] = jnp.zeros_like(acc_ref)

    acc_ref[...] += _masked_sum_f32(x_ref[...], k * chunk, hw)  # (1, C)

    @pl.when(k == pl.num_programs(1) - 1)
    def _finalize():
        y = acc_ref[...] * jnp.float32(1.0 / hw)  # (1, C)
        s = _excite(y, w1t_ref, w2t_ref)          # (1, C) f32
        g_ref[...] = s[:, :, None]                # (1, C, 1)


def _se_scale_kernel(x_ref, g_ref, o_ref):
    o_ref[...] = x_ref[...] * g_ref[...].astype(o_ref.dtype)


def se_forward(x_nchw, w1, w2, *, alias_input=False, max_vmem_bytes=None):
    """SE forward.  x_nchw: (B, C, H, W).
    w1: (hidden, C)  == torch nn.Linear(oup, hidden, bias=False).weight
    w2: (C, hidden)  == torch nn.Linear(hidden, oup, bias=False).weight
    alias_input=True reuses x's buffer for the output (only if the caller drops x)."""
    b, c, h, w = x_nchw.shape
    hw = h * w
    hidden = w1.shape[0]
    dtype = x_nchw.dtype
    itemsize = jnp.dtype(dtype).itemsize

    # No pad / no slice: reshape is a view; the kernel masks the unaligned tail lanes.
    x_flat = x_nchw.reshape(b, c, hw)

    # Weights in the activation dtype (bf16-native MXU); f32 accumulation in-kernel.
    wdt = jnp.bfloat16 if jnp.dtype(dtype) == jnp.dtype(jnp.bfloat16) else jnp.float32
    w1t = jnp.asarray(w1).T.astype(wdt)  # (C, hidden): y @ w1t == y @ W1^T
    w2t = jnp.asarray(w2).T.astype(wdt)  # (hidden, C)
    w_bytes = (w1t.size + w2t.size) * jnp.dtype(wdt).itemsize

    budget = int(max_vmem_bytes) if max_vmem_bytes is not None else _detect_vmem_budget()
    per_batch = c * hw * itemsize
    # 2x double-buffered input + 2x output blocks + ~2 blocks of elementwise/mask temps.
    factor = 6
    overhead = 2 * w_bytes + (1 << 20)
    usable = max(budget - overhead, 0)

    io_alias = {"input_output_aliases": {0: 0}} if alias_input else {}

    if usable >= factor * per_batch:
        # -------- resident path: one HBM read + one HBM write of x (2x traffic) --------
        bt = int(min(b, max(1, usable // (factor * per_batch))))
        if bt >= 8:
            bt = (bt // 8) * 8  # keep the excite matmul sublane-friendly
        grid = (pl.cdiv(b, bt),)

        est_need = factor * bt * per_batch + overhead
        compiler_kwargs = dict(dimension_semantics=("parallel",))
        if est_need > (16 << 20):  # above the smallest (v5e) default scoped-VMEM limit
            compiler_kwargs["vmem_limit_bytes"] = int(
                min(budget, max(est_need + (8 << 20), 64 << 20)))

        cost = pl.CostEstimate(
            flops=int(2 * b * c * hw + 4 * b * c * hidden),
            transcendentals=int(b * (hidden + c)),
            bytes_accessed=int(2 * b * c * hw * itemsize + w_bytes),
        )

        out_flat = pl.pallas_call(
            functools.partial(_se_resident_kernel, hw=hw),
            out_shape=jax.ShapeDtypeStruct((b, c, hw), dtype),
            grid=grid,
            in_specs=[
                pl.BlockSpec((bt, c, hw), lambda i: (i, 0, 0)),
                pl.BlockSpec((c, hidden), lambda i: (0, 0)),   # resident across steps
                pl.BlockSpec((hidden, c), lambda i: (0, 0)),
            ],
            out_specs=pl.BlockSpec((bt, c, hw), lambda i: (i, 0, 0)),
            compiler_params=pltpu.CompilerParams(**compiler_kwargs),
            cost_estimate=cost,
            **io_alias,
        )(x_flat, w1t, w2t)
        return out_flat.reshape(b, c, h, w)

    # -------- chunked fallback: pool+FC pass, then scale pass (3x traffic) --------
    # TODO(synk): also chunk over C (with a cross-chunk FC reduction) if a single
    # (1, C, 128) block ever exceeds the VMEM budget.
    chunk = int(usable // max(5 * c * itemsize, 1))
    chunk = max(_LANE, (chunk // _LANE) * _LANE)
    if chunk >= hw:
        chunk = hw
    nk = pl.cdiv(hw, chunk)

    chunk_need = 5 * c * chunk * itemsize + overhead
    compiler_kwargs = dict(dimension_semantics=("parallel", "arbitrary"))
    if chunk_need > (16 << 20):
        compiler_kwargs["vmem_limit_bytes"] = int(
            min(budget, max(chunk_need + (8 << 20), 64 << 20)))

    gate_cost = pl.CostEstimate(
        flops=int(b * c * hw + 4 * b * c * hidden),
        transcendentals=int(b * (hidden + c)),
        bytes_accessed=int(b * c * hw * itemsize + w_bytes + b * c * 4),
    )
    gates = pl.pallas_call(
        functools.partial(_se_gate_kernel, hw=hw, chunk=chunk),
        out_shape=jax.ShapeDtypeStruct((b, c, 1), jnp.float32),
        grid_spec=pltpu.PrefetchScalarGridSpec(
            num_scalar_prefetch=0,
            grid=(b, nk),
            in_specs=[
                pl.BlockSpec((1, c, chunk), lambda i, k: (i, 0, k)),
                pl.BlockSpec((c, hidden), lambda i, k: (0, 0)),
                pl.BlockSpec((hidden, c), lambda i, k: (0, 0)),
            ],
            out_specs=pl.BlockSpec((1, c, 1), lambda i, k: (i, 0, 0)),
            scratch_shapes=[pltpu.VMEM((1, c), jnp.float32)],
        ),
        compiler_params=pltpu.CompilerParams(**compiler_kwargs),
        cost_estimate=gate_cost,
    )(x_flat, w1t, w2t)

    scale_cost = pl.CostEstimate(
        flops=int(b * c * hw),
        transcendentals=0,
        bytes_accessed=int(2 * b * c * hw * itemsize + b * c * 4),
    )
    out_flat = pl.pallas_call(
        _se_scale_kernel,
        out_shape=jax.ShapeDtypeStruct((b, c, hw), dtype),
        grid=(b, nk),
        in_specs=[
            pl.BlockSpec((1, c, chunk), lambda i, k: (i, 0, k)),
            pl.BlockSpec((1, c, 1), lambda i, k: (i, 0, 0)),
        ],
        out_specs=pl.BlockSpec((1, c, chunk), lambda i, k: (i, 0, k)),
        compiler_params=pltpu.CompilerParams(**compiler_kwargs),
        cost_estimate=scale_cost,
        **io_alias,
    )(x_flat, gates)
    return out_flat.reshape(b, c, h, w)


def se_reference(x_nchw, w1, w2):
    """Pure-JAX reference matching the PyTorch module."""
    y = jnp.mean(x_nchw.astype(jnp.float32), axis=(2, 3))  # (B, C)
    hh = y @ w1.T
    hh = jax.nn.gelu(hh, approximate=False)
    s = jax.nn.sigmoid(hh @ w2.T)
    return (x_nchw.astype(jnp.float32) * s[:, :, None, None]).astype(x_nchw.dtype)


if __name__ == "__main__":
    # SE(inp=8, oup=8, expansion=0.25) -> hidden = int(8 * 0.25) = 2
    B, C, H, W = 2, 8, 16, 16
    INP, OUP = 8, 8
    HIDDEN = int(INP * 0.25)

    key = jax.random.PRNGKey(0)
    kx, k1, k2 = jax.random.split(key, 3)

    x = jax.random.normal(kx, (B, C, H, W), dtype=jnp.float32)
    # Torch Linear weight shapes: (out_features, in_features)
    w1 = jax.random.normal(k1, (HIDDEN, OUP), dtype=jnp.float32) * (1.0 / math.sqrt(OUP))
    w2 = jax.random.normal(k2, (OUP, HIDDEN), dtype=jnp.float32) * (1.0 / math.sqrt(HIDDEN))

    out = se_forward(x, w1, w2)
    jax.block_until_ready(out)
    ref = se_reference(x, w1, w2)
    assert out.shape == (B, C, H, W)
    assert jnp.allclose(out, ref, atol=1e-5, rtol=1e-5), "mismatch vs reference"

    # Non-128-multiple spatial size: exercises the in-kernel tail-lane masking
    # (no wrapper pad / slice anymore).
    x2 = jax.random.normal(kx, (B, C, 14, 14), dtype=jnp.float32)
    out2 = se_forward(x2, w1, w2)
    jax.block_until_ready(out2)
    assert jnp.allclose(out2, se_reference(x2, w1, w2), atol=1e-5, rtol=1e-5), \
        "mismatch vs reference (unaligned HW)"

    # Force the HW-chunked fallback (tiny VMEM budget) so the large-shape path is
    # validated too: pool/FC pass + scale pass, partial last chunk masked.
    x3 = jax.random.normal(kx, (B, C, 20, 20), dtype=jnp.float32)
    out3 = se_forward(x3, w1, w2, max_vmem_bytes=64 * 1024)
    jax.block_until_ready(out3)
    assert jnp.allclose(out3, se_reference(x3, w1, w2), atol=1e-5, rtol=1e-5), \
        "mismatch vs reference (chunked fallback)"

    print("KERNEL_OK")
</pallas_src>

<mosaic_0001>
module attributes {stable_mosaic.version = 11 : i64} {
  func.func @_se_resident_kernel(%arg0: i32, %arg1: memref<2x8x256xf32, #tpu.memory_space<vmem>>, %arg2: memref<8x2xf32, #tpu.memory_space<vmem>>, %arg3: memref<2x8xf32, #tpu.memory_space<vmem>>, %arg4: memref<2x8x256xf32, #tpu.memory_space<vmem>>) attributes {dimension_semantics = [#tpu.dimension_semantics<parallel>], iteration_bounds = array<i64: 1>, scalar_prefetch = 0 : i64, scratch_operands = 0 : i64, tpu.core_type = #tpu.core_type<tc>, window_params = [{transform_indices = @transform_0, window_bounds = array<i64: 2, 8, 256>}, {pipeline_mode = #tpu.pipeline_mode<synchronous>, transform_indices = @transform_1, window_bounds = array<i64: 8, 2>}, {pipeline_mode = #tpu.pipeline_mode<synchronous>, transform_indices = @transform_2, window_bounds = array<i64: 2, 8>}, {transform_indices = @transform_3, window_bounds = array<i64: 2, 8, 256>}]} {
    %c0 = arith.constant 0 : index
    %c0_0 = arith.constant 0 : index
    %c0_1 = arith.constant 0 : index
    %0 = vector.load %arg1[%c0, %c0_0, %c0_1] : memref<2x8x256xf32, #tpu.memory_space<vmem>>, vector<2x8x256xf32>
    %cst = arith.constant dense<0.000000e+00> : vector<2x8xf32>
    %1 = vector.multi_reduction <add>, %0, %cst [2] : vector<2x8x256xf32> to vector<2x8xf32>
    %cst_2 = arith.constant 3.906250e-03 : f32
    %2 = vector.broadcast %cst_2 : f32 to vector<2x8xf32>
    %3 = arith.mulf %1, %2 : vector<2x8xf32>
    %c0_3 = arith.constant 0 : index
    %c0_4 = arith.constant 0 : index
    %4 = vector.load %arg2[%c0_3, %c0_4] : memref<8x2xf32, #tpu.memory_space<vmem>>, vector<8x2xf32>
    %cst_5 = arith.constant dense<0.000000e+00> : vector<2x2xf32>
    %5 = tpu.matmul %3, %4, %cst_5 {dimension_numbers = #tpu.dot_dimension_numbers<[1], [0], [0], [1], [0, 0, 1, 1], [], []>} : vector<2x8xf32>, vector<8x2xf32>, vector<2x2xf32> -> vector<2x2xf32>
    %cst_6 = arith.constant 5.000000e-01 : f32
    %6 = vector.broadcast %cst_6 : f32 to vector<2x2xf32>
    %7 = arith.mulf %6, %5 : vector<2x2xf32>
    %cst_7 = arith.constant 0.707106769 : f32
    %8 = vector.broadcast %cst_7 : f32 to vector<2x2xf32>
    %9 = arith.mulf %5, %8 : vector<2x2xf32>
    %10 = math.erf %9 : vector<2x2xf32>
    %cst_8 = arith.constant 1.000000e+00 : f32
    %11 = vector.broadcast %cst_8 : f32 to vector<2x2xf32>
    %12 = arith.addf %11, %10 : vector<2x2xf32>
    %13 = arith.mulf %7, %12 : vector<2x2xf32>
    %c0_9 = arith.constant 0 : index
    %c0_10 = arith.constant 0 : index
    %14 = vector.load %arg3[%c0_9, %c0_10] : memref<2x8xf32, #tpu.memory_space<vmem>>, vector<2x8xf32>
    %cst_11 = arith.constant dense<0.000000e+00> : vector<2x8xf32>
    %15 = tpu.matmul %13, %14, %cst_11 {dimension_numbers = #tpu.dot_dimension_numbers<[1], [0], [0], [1], [0, 0, 1, 1], [], []>} : vector<2x2xf32>, vector<2x8xf32>, vector<2x8xf32> -> vector<2x8xf32>
    %16 = arith.negf %15 : vector<2x8xf32>
    %17 = math.exp %16 : vector<2x8xf32>
    %cst_12 = arith.constant 1.000000e+00 : f32
    %18 = vector.broadcast %cst_12 : f32 to vector<2x8xf32>
    %19 = arith.addf %18, %17 : vector<2x8xf32>
    %20 = arith.divf %18, %19 : vector<2x8xf32>
    %c0_13 = arith.constant 0 : index
    %c0_14 = arith.constant 0 : index
    %c0_15 = arith.constant 0 : index
    %21 = vector.load %arg1[%c0_13, %c0_14, %c0_15] : memref<2x8x256xf32, #tpu.memory_space<vmem>>, vector<2x8x256xf32>
    %22 = vector.shape_cast %20 : vector<2x8xf32> to vector<2x8x1xf32>
    %23 = vector.broadcast %22 : vector<2x8x1xf32> to vector<2x8x256xf32>
    %24 = arith.mulf %21, %23 : vector<2x8x256xf32>
    %c0_16 = arith.constant 0 : index
    %c0_17 = arith.constant 0 : index
    %c0_18 = arith.constant 0 : index
    %25 = vector.load %arg4[%c0_16, %c0_17, %c0_18] : memref<2x8x256xf32, #tpu.memory_space<vmem>>, vector<2x8x256xf32>
    tpu.vector_store %arg4[%c0_16, %c0_17, %c0_18], %24 {strides = array<i32>} : memref<2x8x256xf32, #tpu.memory_space<vmem>>, vector<2x8x256xf32>,
    return
  }
  func.func @transform_0(%arg0: i32) -> (i32, i32, i32) {
    %c0_i32 = arith.constant 0 : i32
    %c0_i32_0 = arith.constant 0 : i32
    %c0_i32_1 = arith.constant 0 : i32
    return %arg0, %c0_i32, %c0_i32_0 : i32, i32, i32
  }
  func.func @transform_1(%arg0: i32) -> (i32, i32) {
    %c0_i32 = arith.constant 0 : i32
    %c0_i32_0 = arith.constant 0 : i32
    %c0_i32_1 = arith.constant 0 : i32
    return %c0_i32, %c0_i32_0 : i32, i32
  }
  func.func @transform_2(%arg0: i32) -> (i32, i32) {
    %c0_i32 = arith.constant 0 : i32
    %c0_i32_0 = arith.constant 0 : i32
    %c0_i32_1 = arith.constant 0 : i32
    return %c0_i32, %c0_i32_0 : i32, i32
  }
  func.func @transform_3(%arg0: i32) -> (i32, i32, i32) {
    %c0_i32 = arith.constant 0 : i32
    %c0_i32_0 = arith.constant 0 : i32
    %c0_i32_1 = arith.constant 0 : i32
    return %arg0, %c0_i32, %c0_i32_0 : i32, i32, i32
  }
}

</mosaic_0001>

<llo_original>
// kernel: tpu_custom_call.1
$region0: #{tpu_custom_call.1}
  #allocation0 [shape = 'u32[]', space=smem, size = 0x4, offset = 0x4, fixed_abs, tag = 'smem constant byte address 0x4 - core index']
  #allocation1 [shape = 'u32[144,128]{1,0:T(1,128)}', space=vmem, size = 0x12000, scoped, tag = 'internal scratch']
  %s0 = inlined_call_operand.hbm [shape: f32[2,8,256], index: 0, kind: input, shape index: {}]
  %s1 = inlined_call_operand.vmem [shape: f32[8,2], index: 1, kind: input, shape index: {}]
  %s2 = inlined_call_operand.vmem [shape: f32[2,8], index: 2, kind: input, shape index: {}]
  %s3 = inlined_call_operand.hbm [shape: f32[2,8,256], index: 3, kind: output, shape index: {}]
  %s4 = sld [smem:[#allocation0]]
  $region26: #{tpu_custom_call.1} parent=0
    _
  %s6 = ssub.s32 1, %s4
  %s7 = scalar_select 0, %s6, %s4
  $region1: #{tpu_custom_call.1} parent=0
    #allocation2 [shape = 'u8[16384]{0}', space=vmem, size = 0x4000, scoped, tag = 'input window, operand 0, single buffered']
    #allocation3 [shape = 's32[1]{0}', space=sflag, size = 0x4, scoped, tag = 'scoped memory for tpu_custom_call.1']
    #allocation4 [shape = 's32[1]{0}', space=sflag, size = 0x4, scoped, tag = 'scoped memory for tpu_custom_call.1']
    #allocation5 [shape = 'u8[16384]{0}', space=vmem, size = 0x4000, scoped, tag = 'output window, operand 0, single buffered']
    %8 = vsyncpa [#allocation3], 0
    %9 = vsyncpa [#allocation4], 0
    // Predicated region
    $region2: #{tpu_custom_call.1} parent=1 // pred_check
      _
    $region3: #{tpu_custom_call.1} parent=1 // pred_check_branch
      %11 = sbr.rel (0) target = $region5
    $region4: #{tpu_custom_call.1} parent=1 // pred_region
      %s13 = ssub.s32 512, 512
      %14 = vsyncadd [#allocation3], %s13
      %s15 = sshll.u32 [#allocation2], 4
      %s16 = int_to_ptr.vmem [resolvable:$true] %s15
      %21 = dma.hbm_to_vmem [thread:$0]  %s0, 512, %s16, [#allocation3], 256, 256, 16
    $region5: #{tpu_custom_call.1} parent=1 // pred_fallthru
      _
    // Predicated region
    $region6: #{tpu_custom_call.1} parent=1 // pred_check
      _
    $region7: #{tpu_custom_call.1} parent=1 // pred_check_branch
      %23 = sbr.rel (0) target = $region9
    $region8: #{tpu_custom_call.1} parent=1 // pred_region
      _
    $region9: #{tpu_custom_call.1} parent=1 // pred_fallthru
      _
    // Predicated region
    $region10: #{tpu_custom_call.1} parent=1 // pred_check
      _
    $region11: #{tpu_custom_call.1} parent=1 // pred_check_branch
      %25 = sbr.rel (0) target = $region13
    $region12: #{tpu_custom_call.1} parent=1 // pred_region
      _
    $region13: #{tpu_custom_call.1} parent=1 // pred_fallthru
      _
    // Predicated region
    $region14: #{tpu_custom_call.1} parent=1 // pred_check
      _
    $region15: #{tpu_custom_call.1} parent=1 // pred_check_branch
      %27 = sbr.rel (0) target = $region17
    $region16: #{tpu_custom_call.1} parent=1 // pred_region
      %28 = dma.done [#allocation3], 512
    $region17: #{tpu_custom_call.1} parent=1 // pred_fallthru
      _
    %v29 = vld [vmem:[#allocation2] sm:$0xff]
    %v30 = vld [vmem:[#allocation2 + $0x8] sm:$0xff]
    %v31 = vld [vmem:[#allocation2 + $0x10] sm:$0xff]
    %v32 = vld [vmem:[#allocation2 + $0x18] sm:$0xff]
    %v33 = vadd.f32 %v29, %v30
    %34 = vadd.xlane.f32.xlu0 %v33
    %v35 = vpop.xlane.xlu0 %34
    %v36 = vadd.f32 %v31, %v32
    %37 = vadd.xlane.f32.xlu0 %v36
    %v38 = vpop.xlane.xlu0 %37
    %v39 = vmul.f32 %v35, 0.00390625
    %v40 = vmul.f32 %v38, 0.00390625
    %v41 = vld [vmem:[%s1] sm:$0xff]
    %v44 = vlaneseq
    %v45 = vand.u32 %v44, 127
    %v46 = vlaneseq
    %v47 = vshrl.u32 %v46, 7
    %v48 = vsub.s32 %v45, %v47
    %v49 = vrot.slane %v39, %v48
    %v50 = vlaneseq
    %v51 = vshrl.u32 %v50, 7
    %v52 = vsub.s32 %v45, %v51
    %v53 = vrot.slane %v40, %v52
    %vm54 = vcmask 1041409
    %v55 = vsel %vm54, %v53, %v49
    %vm56 = vcmask 64512
    %v57 = vsel %vm56, %v55, 0
    %59 = vmatprep.subr.mxu0 0.0
    %60 = vmatpush1.msra.mxu0 %v41
    %61 = vmatprep.subr.mxu0 0.0
    %62 = vmatpush1.msra.mxu0 0.0
    %63 = vmatprep.subr.mxu0 0.0
    %64 = vmatpush1.msra.mxu0 0.0
    %65 = vmatprep.subr.mxu0 0.0
    %66 = vmatpush1.msra.mxu0 0.0
    %67 = vmatprep.subr.mxu0 0.0
    %68 = vmatpush1.msra.mxu0 0.0
    %69 = vmatprep.subr.mxu0 0.0
    %70 = vmatpush1.msra.mxu0 0.0
    %71 = vmatprep.subr.mxu0 0.0
    %72 = vmatpush1.msra.mxu0 0.0
    %73 = vmatprep.subr.mxu0 0.0
    %74 = vmatpush1.msra.mxu0 0.0
    %75 = vmatprep.subr.mxu0 0.0
    %76 = vmatpush1.msra.mxu0 0.0
    %77 = vmatprep.subr.mxu0 0.0
    %78 = vmatpush1.msra.mxu0 0.0
    %79 = vmatprep.subr.mxu0 0.0
    %80 = vmatpush1.msra.mxu0 0.0
    %81 = vmatprep.subr.mxu0 0.0
    %82 = vmatpush1.msra.mxu0 0.0
    %83 = vmatprep.subr.mxu0 0.0
    %84 = vmatpush1.msra.mxu0 0.0
    %85 = vmatprep.subr.mxu0 0.0
    %86 = vmatpush1.msra.mxu0 0.0
    %87 = vmatprep.subr.mxu0 0.0
    %88 = vmatpush1.msra.mxu0 0.0
    %89 = vmatprep.subr.mxu0 0.0
    %90 = vmatpush1.msra.mxu0 0.0
    %91 = vmatprep.subr.mxu0 0.0
    %92 = vmatpush1.msra.mxu0 0.0
    %93 = vmatprep.subr.mxu0 0.0
    %94 = vmatpush1.msra.mxu0 0.0
    %95 = vmatprep.subr.mxu0 0.0
    %96 = vmatpush1.msra.mxu0 0.0
    %97 = vmatprep.subr.mxu0 0.0
    %98 = vmatpush1.msra.mxu0 0.0
    %99 = vmatprep.subr.mxu0 0.0
    %100 = vmatpush1.msra.mxu0 0.0
    %101 = vmatprep.subr.mxu0 0.0
    %102 = vmatpush1.msra.mxu0 0.0
    %103 = vmatprep.subr.mxu0 0.0
    %104 = vmatpush1.msra.mxu0 0.0
    %105 = vmatprep.subr.mxu0 0.0
    %106 = vmatpush1.msra.mxu0 0.0
    %107 = vmatprep.subr.mxu0 0.0
    %108 = vmatpush1.msra.mxu0 0.0
    %109 = vmatprep.subr.mxu0 0.0
    %110 = vmatpush1.msra.mxu0 0.0
    %111 = vmatprep.subr.mxu0 0.0
    %112 = vmatpush1.msra.mxu0 0.0
    %113 = vmatprep.subr.mxu0 0.0
    %114 = vmatpush1.msra.mxu0 0.0
    %115 = vmatprep.subr.mxu0 0.0
    %116 = vmatpush1.msra.mxu0 0.0
    %117 = vmatprep.subr.mxu0 0.0
    %118 = vmatpush1.msra.mxu0 0.0
    %119 = vmatprep.subr.mxu0 0.0
    %120 = vmatpush1.msra.mxu0 0.0
    %121 = vmatprep.subr.mxu0 0.0
    %122 = vmatpush1.msra.mxu0 0.0
    %123 = vmatprep.mubr.f32.mxu0 0.0
    %124 = vmatmul.mubr.f32.gmra.mrb[0].mxu0 %v57
    %v125 = vpop.f32.mrb[0].mxu0
    %v126 = vadd.f32 0.0, %v125
    %v127 = vpop.f32.mrb[0].mxu0
    %128 = vdwg.mxu0
    %v129 = vmul.f32 %v126, 0.5
    %v130 = vmul.f32 %v126, 0.70710677
    %v131 = verf.f32.pop %v130
    %v132 = vadd.f32 %v131, 1.0
    %v133 = vmul.f32 %v129, %v132
    %v134 = vld [vmem:[%s2] sm:$0x3]
    %vm135 = vcmask 15360
    %v137 = vsel %vm135, %v133, 0
    %vm139 = vcmask 1041408
    %v141 = vsel %vm139, %v134, 0
    %143 = vmatprep.subr.mxu0 0.0
    %144 = vmatpush1.msra.mxu0 %v141
    %145 = vmatprep.subr.mxu0 0.0
    %146 = vmatpush1.msra.mxu0 0.0
    %147 = vmatprep.subr.mxu0 0.0
    %148 = vmatpush1.msra.mxu0 0.0
    %149 = vmatprep.subr.mxu0 0.0
    %150 = vmatpush1.msra.mxu0 0.0
    %151 = vmatprep.subr.mxu0 0.0
    %152 = vmatpush1.msra.mxu0 0.0
    %153 = vmatprep.subr.mxu0 0.0
    %154 = vmatpush1.msra.mxu0 0.0
    %155 = vmatprep.subr.mxu0 0.0
    %156 = vmatpush1.msra.mxu0 0.0
    %157 = vmatprep.subr.mxu0 0.0
    %158 = vmatpush1.msra.mxu0 0.0
    %159 = vmatprep.subr.mxu0 0.0
    %160 = vmatpush1.msra.mxu0 0.0
    %161 = vmatprep.subr.mxu0 0.0
    %162 = vmatpush1.msra.mxu0 0.0
    %163 = vmatprep.subr.mxu0 0.0
    %164 = vmatpush1.msra.mxu0 0.0
    %165 = vmatprep.subr.mxu0 0.0
    %166 = vmatpush1.msra.mxu0 0.0
    %167 = vmatprep.subr.mxu0 0.0
    %168 = vmatpush1.msra.mxu0 0.0
    %169 = vmatprep.subr.mxu0 0.0
    %170 = vmatpush1.msra.mxu0 0.0
    %171 = vmatprep.subr.mxu0 0.0
    %172 = vmatpush1.msra.mxu0 0.0
    %173 = vmatprep.subr.mxu0 0.0
    %174 = vmatpush1.msra.mxu0 0.0
    %175 = vmatprep.subr.mxu0 0.0
    %176 = vmatpush1.msra.mxu0 0.0
    %177 = vmatprep.subr.mxu0 0.0
    %178 = vmatpush1.msra.mxu0 0.0
    %179 = vmatprep.subr.mxu0 0.0
    %180 = vmatpush1.msra.mxu0 0.0
    %181 = vmatprep.subr.mxu0 0.0
    %182 = vmatpush1.msra.mxu0 0.0
    %183 = vmatprep.subr.mxu0 0.0
    %184 = vmatpush1.msra.mxu0 0.0
    %185 = vmatprep.subr.mxu0 0.0
    %186 = vmatpush1.msra.mxu0 0.0
    %187 = vmatprep.subr.mxu0 0.0
    %188 = vmatpush1.msra.mxu0 0.0
    %189 = vmatprep.subr.mxu0 0.0
    %190 = vmatpush1.msra.mxu0 0.0
    %191 = vmatprep.subr.mxu0 0.0
    %192 = vmatpush1.msra.mxu0 0.0
    %193 = vmatprep.subr.mxu0 0.0
    %194 = vmatpush1.msra.mxu0 0.0
    %195 = vmatprep.subr.mxu0 0.0
    %196 = vmatpush1.msra.mxu0 0.0
    %197 = vmatprep.subr.mxu0 0.0
    %198 = vmatpush1.msra.mxu0 0.0
    %199 = vmatprep.subr.mxu0 0.0
    %200 = vmatpush1.msra.mxu0 0.0
    %201 = vmatprep.subr.mxu0 0.0
    %202 = vmatpush1.msra.mxu0 0.0
    %203 = vmatprep.subr.mxu0 0.0
    %204 = vmatpush1.msra.mxu0 0.0
    %205 = vmatprep.subr.mxu0 0.0
    %206 = vmatpush1.msra.mxu0 0.0
    %207 = vmatprep.mubr.f32.mxu0 0.0
    %208 = vmatmul.mubr.f32.gmra.mrb[0].mxu0 %v137
    %v209 = vpop.f32.mrb[0].mxu0
    %v210 = vadd.f32 0.0, %v209
    %v211 = vpop.f32.mrb[0].mxu0
    %212 = vdwg.mxu0
    %v213 = vxor.u32 %v210, 2147483648
    %v214 = vmul.f32 %v213, 1.442695
    %v215 = vpow.pop %v214
    %v216 = vadd.f32 %v215, 1.0
    %v217 = vrcp.pop %v216
    %v218 = vmul.f32 1.0, %v217
    %v219 = vlaneseq
    %v220 = vshrl.u32 %v219, 7
    %v221 = vsub.s32 0, %v220
    %v222 = vrot.slane %v218, %v221
    %224 = vbcast.lane.b32.xlu0 %v222, 256
    %v225 = vpop.permute.xlu0 %224
    %v226 = vlaneseq
    %v227 = vshrl.u32 %v226, 7
    %v228 = vsub.s32 1, %v227
    %v229 = vrot.slane %v218, %v228
    %231 = vbcast.lane.b32.xlu0 %v229, 256
    %v232 = vpop.permute.xlu0 %231
    %v233 = vmul.f32 %v29, %v225
    %v234 = vmul.f32 %v30, %v225
    %v235 = vmul.f32 %v31, %v232
    %v236 = vmul.f32 %v32, %v232
    %237 = vst [vmem:[#allocation5] sm:$0xff] %v233
    %238 = vst [vmem:[#allocation5 + $0x8] sm:$0xff] %v234
    %239 = vst [vmem:[#allocation5 + $0x10] sm:$0xff] %v235
    %240 = vst [vmem:[#allocation5 + $0x18] sm:$0xff] %v236
    // Predicated region
    $region18: #{tpu_custom_call.1} parent=1 // pred_check
      _
    $region19: #{tpu_custom_call.1} parent=1 // pred_check_branch
      %242 = sbr.rel (0) target = $region21
    $region20: #{tpu_custom_call.1} parent=1 // pred_region
      %s244 = ssub.s32 512, 512
      %245 = vsyncadd [#allocation4], %s244
      %s246 = sshll.u32 [#allocation5], 4
      %s247 = int_to_ptr.vmem [resolvable:$true] %s246
      %252 = dma.vmem_to_hbm [thread:$0]  %s247, 512, %s3, [#allocation4], 256, 256, 16
    $region21: #{tpu_custom_call.1} parent=1 // pred_fallthru
      _
    // Predicated region
    $region22: #{tpu_custom_call.1} parent=1 // pred_check
      _
    $region23: #{tpu_custom_call.1} parent=1 // pred_check_branch
      %254 = sbr.rel (0) target = $region25
    $region24: #{tpu_custom_call.1} parent=1 // pred_region
      %255 = dma.done [#allocation4], 512
    $region25: #{tpu_custom_call.1} parent=1 // pred_fallthru
      _
    %256 = vsyncpa [#allocation3], 1
    %257 = vsyncpa [#allocation4], 1

</llo_original>
